<compile_context>
chip_gen: v5e
topology: v5e:2x2
jax: 0.10.0
libtpu: 0.0.40
codegen_flags: <defaults>
</compile_context>

<pallas_src>
import functools

import jax
import jax.numpy as jnp
from jax.experimental import pallas as pl
from jax.experimental.pallas import tpu as pltpu


# ----------------------------------------------------------------------------
# Pallas kernel:  out[m,n] = sum_k patches[m,k] @ w_scaled[k,n]
#                 epilogue: + bias (+ residual) (ReLU)
# The f32 output block itself is the accumulator (revisited across grid axis k).
# ----------------------------------------------------------------------------
def _conv_kernel(p_ref, w_ref, b_ref, *rest, apply_relu, has_residual):
    if has_residual:
        r_ref, o_ref = rest
    else:
        (o_ref,) = rest

    k = pl.program_id(2)

    @pl.when(k == 0)
    def _():
        o_ref[...] = jnp.zeros_like(o_ref)

    o_ref[...] += jnp.dot(p_ref[...], w_ref[...],
                          preferred_element_type=jnp.float32)

    @pl.when(k == pl.num_programs(2) - 1)
    def _():
        y = o_ref[...] + b_ref[...]
        if has_residual:
            y = y + r_ref[...]
        if apply_relu:
            y = jnp.maximum(y, 0.0)
        o_ref[...] = y


# ----------------------------------------------------------------------------
# JAX glue: im2col, tile selection, pallas_call wrapper
# ----------------------------------------------------------------------------
def _im2col(x, kh, kw, stride, pad):
    # x: (N, H, W, C) -> patches (N*Ho*Wo, kh*kw*C)
    N, H, W, C = x.shape
    xp = jnp.pad(x, ((0, 0), (pad, pad), (pad, pad), (0, 0)))
    Ho = (H + 2 * pad - kh) // stride + 1
    Wo = (W + 2 * pad - kw) // stride + 1
    cols = []
    for i in range(kh):
        for j in range(kw):
            cols.append(xp[:, i:i + stride * Ho:stride,
                           j:j + stride * Wo:stride, :])
    patches = jnp.stack(cols, axis=3)  # (N, Ho, Wo, kh*kw, C)
    return patches.reshape(N * Ho * Wo, kh * kw * C), Ho, Wo


def _pick_tk(K):
    """Reduction tile: full K when it fits comfortably, otherwise an exact
    128-aligned divisor -> never any K padding / wasted MXU work."""
    if K <= 2048:
        return K
    for cand in (512, 384, 256, 128):
        if K % cand == 0:
            return cand
    return K


def conv_bn_act(x, w, scale, bias, *, stride, relu, residual=None):
    """Fused conv + folded-BN + optional residual add + optional ReLU."""
    KH, KW, Cin, Cout = w.shape
    pad = (KH - 1) // 2  # 3x3 -> pad 1, 1x1 -> pad 0 (matches the module)
    N = x.shape[0]

    patches, Ho, Wo = _im2col(x, KH, KW, stride, pad)
    M, K = patches.shape

    # Fold the BN scale into the weight columns; kernel epilogue only adds bias.
    w2 = (w.reshape(K, Cout) * scale[None, :]).astype(jnp.bfloat16)
    patches = patches.astype(jnp.bfloat16)
    b2 = bias.reshape(1, Cout).astype(jnp.float32)

    # ---- tile selection (exact divisors, no K/N padding) --------------------
    if M <= 512:
        TM, Mp = M, M
    else:
        TM = 256
        Mp = ((M + TM - 1) // TM) * TM
        patches = jnp.pad(patches, ((0, Mp - M), (0, 0)))
    TN = Cout if Cout <= 256 else 256
    TK = _pick_tk(K)

    grid = (Mp // TM, Cout // TN, K // TK)

    in_specs = [
        pl.BlockSpec((TM, TK), lambda m, n, k: (m, k)),   # patches (bf16)
        pl.BlockSpec((TK, TN), lambda m, n, k: (k, n)),   # scaled weight (bf16)
        pl.BlockSpec((1, TN), lambda m, n, k: (0, n)),    # folded BN bias (f32)
    ]
    args = [patches, w2, b2]
    if residual is not None:
        r = residual.reshape(M, Cout).astype(jnp.float32)
        if Mp != M:
            r = jnp.pad(r, ((0, Mp - M), (0, 0)))
        in_specs.append(pl.BlockSpec((TM, TN), lambda m, n, k: (m, n)))
        args.append(r)

    out = pl.pallas_call(
        functools.partial(_conv_kernel, apply_relu=relu,
                          has_residual=residual is not None),
        out_shape=jax.ShapeDtypeStruct((Mp, Cout), jnp.float32),
        grid_spec=pltpu.PrefetchScalarGridSpec(
            num_scalar_prefetch=0,
            grid=grid,
            in_specs=in_specs,
            out_specs=pl.BlockSpec((TM, TN), lambda m, n, k: (m, n)),
        ),
        compiler_params=pltpu.CompilerParams(
            dimension_semantics=("parallel", "parallel", "arbitrary")),
    )(*args)

    return out[:M].reshape(N, Ho, Wo, Cout)


# ----------------------------------------------------------------------------
# Parameter init (deterministic, mirrors the module's __init__)
# ----------------------------------------------------------------------------
def _kaiming(key, kh, kw, cin, cout):
    fan_out = cout * kh * kw  # kaiming_normal_ mode='fan_out', relu
    std = (2.0 / fan_out) ** 0.5
    return jax.random.normal(key, (kh, kw, cin, cout), jnp.float32) * std


def _bn_params(c, eps=1e-5):
    gamma = jnp.ones((c,), jnp.float32)
    beta = jnp.zeros((c,), jnp.float32)
    mean = jnp.zeros((c,), jnp.float32)
    var = jnp.ones((c,), jnp.float32)
    scale = gamma / jnp.sqrt(var + eps)
    bias = beta - mean * scale
    return scale, bias


def init_resnet_small_z(key, in_channels=3, layers=(1, 1, 1, 1)):
    keys = iter(jax.random.split(key, 256))
    params = {}
    params["conv1_w"] = _kaiming(next(keys), 3, 3, in_channels, 64)
    params["bn1"] = _bn_params(64)

    inplanes = 64
    stage_planes = [64, 128, 256, 512]
    stage_strides = [1, 2, 2, 2]
    stages = []
    for planes, stride, blocks in zip(stage_planes, stage_strides, layers):
        # _make_layer appends the first block, (blocks-2) middle blocks and a
        # final block -> always at least 2 blocks per stage.
        n_blocks = max(2, blocks)
        blist = []
        for bi in range(n_blocks):
            s = stride if bi == 0 else 1
            bp = {"stride": s}
            bp["conv1_w"] = _kaiming(next(keys), 3, 3, inplanes, planes)
            bp["bn1"] = _bn_params(planes)
            bp["conv2_w"] = _kaiming(next(keys), 3, 3, planes, planes)
            bp["bn2"] = _bn_params(planes)
            if s != 1 or inplanes != planes:  # option 'B' downsample
                bp["ds_w"] = _kaiming(next(keys), 1, 1, inplanes, planes)
                bp["ds_bn"] = _bn_params(planes)
            inplanes = planes
            blist.append(bp)
        stages.append(blist)
    params["stages"] = stages
    return params


# ----------------------------------------------------------------------------
# Forward pass
# ----------------------------------------------------------------------------
def basic_block_fwd(x, bp):
    s = bp["stride"]
    out = conv_bn_act(x, bp["conv1_w"], *bp["bn1"], stride=s, relu=True)
    if "ds_w" in bp:
        identity = conv_bn_act(x, bp["ds_w"], *bp["ds_bn"], stride=s,
                               relu=False)
    else:
        identity = x
    # conv2 -> bn2 -> += identity -> relu   (fused in one kernel)
    out = conv_bn_act(out, bp["conv2_w"], *bp["bn2"], stride=1, relu=True,
                      residual=identity)
    return out


def resnet_small_z_fwd(x_nchw, params):
    x = jnp.transpose(x_nchw, (0, 2, 3, 1))  # NCHW -> NHWC
    x = conv_bn_act(x, params["conv1_w"], *params["bn1"], stride=1, relu=True)
    for stage in params["stages"]:
        for bp in stage:
            x = basic_block_fwd(x, bp)
    return jnp.transpose(x, (0, 3, 1, 2))  # NHWC -> NCHW


# ----------------------------------------------------------------------------
if __name__ == "__main__":
    key = jax.random.PRNGKey(0)
    k_param, k_x = jax.random.split(key)

    params = init_resnet_small_z(k_param, in_channels=3, layers=(1, 1, 1, 1))

    # Small NCHW input consistent with the module: batch=2, 3 channels, 16x16.
    x = jax.random.normal(k_x, (2, 3, 16, 16), jnp.float32)

    y = resnet_small_z_fwd(x, params)
    y = jax.block_until_ready(y)

    assert y.shape == (2, 512, 2, 2), y.shape
    assert jnp.all(jnp.isfinite(y))
    print("KERNEL_OK")
</pallas_src>

<mosaic_0001>
module attributes {stable_mosaic.version = 11 : i64} {
  func.func @_conv_kernel(%arg0: i32, %arg1: i32, %arg2: i32, %arg3: memref<512x27xbf16, #tpu.memory_space<vmem>>, %arg4: memref<27x64xbf16, #tpu.memory_space<vmem>>, %arg5: memref<1x64xf32, #tpu.memory_space<vmem>>, %arg6: memref<512x64xf32, #tpu.memory_space<vmem>>) attributes {dimension_semantics = [#tpu.dimension_semantics<parallel>, #tpu.dimension_semantics<parallel>, #tpu.dimension_semantics<arbitrary>], iteration_bounds = array<i64: 1, 1, 1>, scalar_prefetch = 0 : i64, scratch_operands = 0 : i64, tpu.core_type = #tpu.core_type<tc>, window_params = [{transform_indices = @transform_0, window_bounds = array<i64: 512, 27>}, {transform_indices = @transform_1, window_bounds = array<i64: 27, 64>}, {transform_indices = @transform_2, window_bounds = array<i64: 1, 64>}, {transform_indices = @transform_3, window_bounds = array<i64: 512, 64>}]} {
    %c0_i32 = arith.constant 0 : i32
    %0 = arith.cmpi eq, %arg2, %c0_i32 : i32
    %1 = arith.extui %0 : i1 to i32
    %c0_i32_0 = arith.constant 0 : i32
    %2 = arith.cmpi ne, %1, %c0_i32_0 : i32
    scf.if %2 {
      %cst_10 = arith.constant 0.000000e+00 : f32
      %12 = vector.broadcast %cst_10 : f32 to vector<512x64xf32>
      %c0_11 = arith.constant 0 : index
      %c0_12 = arith.constant 0 : index
      %13 = vector.load %arg6[%c0_11, %c0_12] : memref<512x64xf32, #tpu.memory_space<vmem>>, vector<512x64xf32>
      tpu.vector_store %arg6[%c0_11, %c0_12], %12 {strides = array<i32>} : memref<512x64xf32, #tpu.memory_space<vmem>>, vector<512x64xf32>,
    } else {
    }
    %c0 = arith.constant 0 : index
    %c0_1 = arith.constant 0 : index
    %3 = vector.load %arg6[%c0, %c0_1] : memref<512x64xf32, #tpu.memory_space<vmem>>, vector<512x64xf32>
    %c0_2 = arith.constant 0 : index
    %c0_3 = arith.constant 0 : index
    %4 = vector.load %arg3[%c0_2, %c0_3] : memref<512x27xbf16, #tpu.memory_space<vmem>>, vector<512x27xbf16>
    %c0_4 = arith.constant 0 : index
    %c0_5 = arith.constant 0 : index
    %5 = vector.load %arg4[%c0_4, %c0_5] : memref<27x64xbf16, #tpu.memory_space<vmem>>, vector<27x64xbf16>
    %cst = arith.constant dense<0.000000e+00> : vector<512x64xf32>
    %6 = tpu.matmul %4, %5, %cst {dimension_numbers = #tpu.dot_dimension_numbers<[1], [0], [0], [1], [0, 0, 1, 1], [], []>} : vector<512x27xbf16>, vector<27x64xbf16>, vector<512x64xf32> -> vector<512x64xf32>
    %7 = arith.addf %3, %6 : vector<512x64xf32>
    %c0_6 = arith.constant 0 : index
    %c0_7 = arith.constant 0 : index
    %8 = vector.load %arg6[%c0_6, %c0_7] : memref<512x64xf32, #tpu.memory_space<vmem>>, vector<512x64xf32>
    tpu.vector_store %arg6[%c0_6, %c0_7], %7 {strides = array<i32>} : memref<512x64xf32, #tpu.memory_space<vmem>>, vector<512x64xf32>,
    %c0_i32_8 = arith.constant 0 : i32
    %9 = arith.cmpi eq, %arg2, %c0_i32_8 : i32
    %10 = arith.extui %9 : i1 to i32
    %c0_i32_9 = arith.constant 0 : i32
    %11 = arith.cmpi ne, %10, %c0_i32_9 : i32
    scf.if %11 {
      %c0_10 = arith.constant 0 : index
      %c0_11 = arith.constant 0 : index
      %12 = vector.load %arg6[%c0_10, %c0_11] : memref<512x64xf32, #tpu.memory_space<vmem>>, vector<512x64xf32>
      %c0_12 = arith.constant 0 : index
      %c0_13 = arith.constant 0 : index
      %13 = vector.load %arg5[%c0_12, %c0_13] : memref<1x64xf32, #tpu.memory_space<vmem>>, vector<1x64xf32>
      %14 = vector.broadcast %13 : vector<1x64xf32> to vector<512x64xf32>
      %15 = arith.addf %12, %14 : vector<512x64xf32>
      %cst_14 = arith.constant 0.000000e+00 : f32
      %16 = vector.broadcast %cst_14 : f32 to vector<512x64xf32>
      %17 = arith.maximumf %15, %16 : vector<512x64xf32>
      %c0_15 = arith.constant 0 : index
      %c0_16 = arith.constant 0 : index
      %18 = vector.load %arg6[%c0_15, %c0_16] : memref<512x64xf32, #tpu.memory_space<vmem>>, vector<512x64xf32>
      tpu.vector_store %arg6[%c0_15, %c0_16], %17 {strides = array<i32>} : memref<512x64xf32, #tpu.memory_space<vmem>>, vector<512x64xf32>,
    } else {
    }
    return
  }
  func.func @transform_0(%arg0: i32, %arg1: i32, %arg2: i32) -> (i32, i32) {
    %c0_i32 = arith.constant 0 : i32
    return %arg0, %arg2 : i32, i32
  }
  func.func @transform_1(%arg0: i32, %arg1: i32, %arg2: i32) -> (i32, i32) {
    %c0_i32 = arith.constant 0 : i32
    return %arg2, %arg1 : i32, i32
  }
  func.func @transform_2(%arg0: i32, %arg1: i32, %arg2: i32) -> (i32, i32) {
    %c0_i32 = arith.constant 0 : i32
    %c0_i32_0 = arith.constant 0 : i32
    return %c0_i32, %arg1 : i32, i32
  }
  func.func @transform_3(%arg0: i32, %arg1: i32, %arg2: i32) -> (i32, i32) {
    %c0_i32 = arith.constant 0 : i32
    return %arg0, %arg1 : i32, i32
  }
}

</mosaic_0001>

<llo_original>
// kernel: tpu_custom_call.1
$region0: #{tpu_custom_call.1}
  #allocation0 [shape = 'u32[]', space=smem, size = 0x4, offset = 0x4, fixed_abs, tag = 'smem constant byte address 0x4 - core index']
  #allocation1 [shape = 'u32[72,128]{1,0:T(1,128)}', space=vmem, size = 0x9000, scoped, tag = 'internal scratch']
  %s0 = inlined_call_operand.vmem [shape: bf16[512,27], index: 0, kind: input, shape index: {}]
  %s1 = inlined_call_operand.vmem [shape: bf16[27,64], index: 1, kind: input, shape index: {}]
  %s2 = inlined_call_operand.vmem [shape: f32[1,64], index: 2, kind: input, shape index: {}]
  %s3 = inlined_call_operand.vmem [shape: f32[512,64], index: 3, kind: output, shape index: {}]
  %s4 = sld [smem:[#allocation0]]
  $region30: #{tpu_custom_call.1} parent=0
    _
  %s6 = ssub.s32 1, %s4
  %s7 = scalar_select 0, %s6, %s4
  // Predicated region
  $region2: #{tpu_custom_call.1} parent=0 // pred_check
    _
  $region3: #{tpu_custom_call.1} parent=0 // pred_check_branch
    %9 = sbr.rel (0) target = $region5
  $region4: #{tpu_custom_call.1} parent=0 // pred_region
    _
  $region5: #{tpu_custom_call.1} parent=0 // pred_fallthru
    _
  // Predicated region
  $region6: #{tpu_custom_call.1} parent=0 // pred_check
    _
  $region7: #{tpu_custom_call.1} parent=0 // pred_check_branch
    %11 = sbr.rel (0) target = $region9
  $region8: #{tpu_custom_call.1} parent=0 // pred_region
    _
  $region9: #{tpu_custom_call.1} parent=0 // pred_fallthru
    _
  // Predicated region
  $region10: #{tpu_custom_call.1} parent=0 // pred_check
    _
  $region11: #{tpu_custom_call.1} parent=0 // pred_check_branch
    %13 = sbr.rel (0) target = $region13
  $region12: #{tpu_custom_call.1} parent=0 // pred_region
    _
  $region13: #{tpu_custom_call.1} parent=0 // pred_fallthru
    _
  %p15 = scmp.eq.s32.totalorder 0, 0
  // Predicated region
  $region14: #{tpu_custom_call.1} parent=0 // pred_check
    %p16 = pneg %p15
  $region15: #{tpu_custom_call.1} parent=0 // pred_check_branch
    %18 = sbr.rel (%p16) target = $region17
  $region16: #{tpu_custom_call.1} parent=0 // pred_region
    %vm19 = vcmask 523264
    %20 = vst.msk [vmem:[%s3] sm:$0xff] %vm19, 0.0
    %21 = vst.msk [vmem:[%s3 + $0x8] sm:$0xff] %vm19, 0.0
    %22 = vst.msk [vmem:[%s3 + $0x10] sm:$0xff] %vm19, 0.0
    %23 = vst.msk [vmem:[%s3 + $0x18] sm:$0xff] %vm19, 0.0
    %24 = vst.msk [vmem:[%s3 + $0x20] sm:$0xff] %vm19, 0.0
    %25 = vst.msk [vmem:[%s3 + $0x28] sm:$0xff] %vm19, 0.0
    %26 = vst.msk [vmem:[%s3 + $0x30] sm:$0xff] %vm19, 0.0
    %27 = vst.msk [vmem:[%s3 + $0x38] sm:$0xff] %vm19, 0.0
    %28 = vst.msk [vmem:[%s3 + $0x40] sm:$0xff] %vm19, 0.0
    %29 = vst.msk [vmem:[%s3 + $0x48] sm:$0xff] %vm19, 0.0
    %30 = vst.msk [vmem:[%s3 + $0x50] sm:$0xff] %vm19, 0.0
    %31 = vst.msk [vmem:[%s3 + $0x58] sm:$0xff] %vm19, 0.0
    %32 = vst.msk [vmem:[%s3 + $0x60] sm:$0xff] %vm19, 0.0
    %33 = vst.msk [vmem:[%s3 + $0x68] sm:$0xff] %vm19, 0.0
    %34 = vst.msk [vmem:[%s3 + $0x70] sm:$0xff] %vm19, 0.0
    %35 = vst.msk [vmem:[%s3 + $0x78] sm:$0xff] %vm19, 0.0
    %36 = vst.msk [vmem:[%s3 + $0x80] sm:$0xff] %vm19, 0.0
    %37 = vst.msk [vmem:[%s3 + $0x88] sm:$0xff] %vm19, 0.0
    %38 = vst.msk [vmem:[%s3 + $0x90] sm:$0xff] %vm19, 0.0
    %39 = vst.msk [vmem:[%s3 + $0x98] sm:$0xff] %vm19, 0.0
    %40 = vst.msk [vmem:[%s3 + $0xa0] sm:$0xff] %vm19, 0.0
    %41 = vst.msk [vmem:[%s3 + $0xa8] sm:$0xff] %vm19, 0.0
    %42 = vst.msk [vmem:[%s3 + $0xb0] sm:$0xff] %vm19, 0.0
    %43 = vst.msk [vmem:[%s3 + $0xb8] sm:$0xff] %vm19, 0.0
    %44 = vst.msk [vmem:[%s3 + $0xc0] sm:$0xff] %vm19, 0.0
    %45 = vst.msk [vmem:[%s3 + $0xc8] sm:$0xff] %vm19, 0.0
    %46 = vst.msk [vmem:[%s3 + $0xd0] sm:$0xff] %vm19, 0.0
    %47 = vst.msk [vmem:[%s3 + $0xd8] sm:$0xff] %vm19, 0.0
    %48 = vst.msk [vmem:[%s3 + $0xe0] sm:$0xff] %vm19, 0.0
    %49 = vst.msk [vmem:[%s3 + $0xe8] sm:$0xff] %vm19, 0.0
    %50 = vst.msk [vmem:[%s3 + $0xf0] sm:$0xff] %vm19, 0.0
    %51 = vst.msk [vmem:[%s3 + $0xf8] sm:$0xff] %vm19, 0.0
    %52 = vst.msk [vmem:[%s3 + $0x100] sm:$0xff] %vm19, 0.0
    %53 = vst.msk [vmem:[%s3 + $0x108] sm:$0xff] %vm19, 0.0
    %54 = vst.msk [vmem:[%s3 + $0x110] sm:$0xff] %vm19, 0.0
    %55 = vst.msk [vmem:[%s3 + $0x118] sm:$0xff] %vm19, 0.0
    %56 = vst.msk [vmem:[%s3 + $0x120] sm:$0xff] %vm19, 0.0
    %57 = vst.msk [vmem:[%s3 + $0x128] sm:$0xff] %vm19, 0.0
    %58 = vst.msk [vmem:[%s3 + $0x130] sm:$0xff] %vm19, 0.0
    %59 = vst.msk [vmem:[%s3 + $0x138] sm:$0xff] %vm19, 0.0
    %60 = vst.msk [vmem:[%s3 + $0x140] sm:$0xff] %vm19, 0.0
    %61 = vst.msk [vmem:[%s3 + $0x148] sm:$0xff] %vm19, 0.0
    %62 = vst.msk [vmem:[%s3 + $0x150] sm:$0xff] %vm19, 0.0
    %63 = vst.msk [vmem:[%s3 + $0x158] sm:$0xff] %vm19, 0.0
    %64 = vst.msk [vmem:[%s3 + $0x160] sm:$0xff] %vm19, 0.0
    %65 = vst.msk [vmem:[%s3 + $0x168] sm:$0xff] %vm19, 0.0
    %66 = vst.msk [vmem:[%s3 + $0x170] sm:$0xff] %vm19, 0.0
    %67 = vst.msk [vmem:[%s3 + $0x178] sm:$0xff] %vm19, 0.0
    %68 = vst.msk [vmem:[%s3 + $0x180] sm:$0xff] %vm19, 0.0
    %69 = vst.msk [vmem:[%s3 + $0x188] sm:$0xff] %vm19, 0.0
    %70 = vst.msk [vmem:[%s3 + $0x190] sm:$0xff] %vm19, 0.0
    %71 = vst.msk [vmem:[%s3 + $0x198] sm:$0xff] %vm19, 0.0
    %72 = vst.msk [vmem:[%s3 + $0x1a0] sm:$0xff] %vm19, 0.0
    %73 = vst.msk [vmem:[%s3 + $0x1a8] sm:$0xff] %vm19, 0.0
    %74 = vst.msk [vmem:[%s3 + $0x1b0] sm:$0xff] %vm19, 0.0
    %75 = vst.msk [vmem:[%s3 + $0x1b8] sm:$0xff] %vm19, 0.0
    %76 = vst.msk [vmem:[%s3 + $0x1c0] sm:$0xff] %vm19, 0.0
    %77 = vst.msk [vmem:[%s3 + $0x1c8] sm:$0xff] %vm19, 0.0
    %78 = vst.msk [vmem:[%s3 + $0x1d0] sm:$0xff] %vm19, 0.0
    %79 = vst.msk [vmem:[%s3 + $0x1d8] sm:$0xff] %vm19, 0.0
    %80 = vst.msk [vmem:[%s3 + $0x1e0] sm:$0xff] %vm19, 0.0
    %81 = vst.msk [vmem:[%s3 + $0x1e8] sm:$0xff] %vm19, 0.0
    %82 = vst.msk [vmem:[%s3 + $0x1f0] sm:$0xff] %vm19, 0.0
    %83 = vst.msk [vmem:[%s3 + $0x1f8] sm:$0xff] %vm19, 0.0
  $region17: #{tpu_custom_call.1} parent=0 // pred_fallthru
    _
  %v84 = vld [vmem:[%s3] sm:$0xff]
  %v85 = vld [vmem:[%s3 + $0x8] sm:$0xff]
  %v86 = vld [vmem:[%s3 + $0x10] sm:$0xff]
  %v87 = vld [vmem:[%s3 + $0x18] sm:$0xff]
  %v88 = vld [vmem:[%s3 + $0x20] sm:$0xff]
  %v89 = vld [vmem:[%s3 + $0x28] sm:$0xff]
  %v90 = vld [vmem:[%s3 + $0x30] sm:$0xff]
  %v91 = vld [vmem:[%s3 + $0x38] sm:$0xff]
  %v92 = vld [vmem:[%s3 + $0x40] sm:$0xff]
  %v93 = vld [vmem:[%s3 + $0x48] sm:$0xff]
  %v94 = vld [vmem:[%s3 + $0x50] sm:$0xff]
  %v95 = vld [vmem:[%s3 + $0x58] sm:$0xff]
  %v96 = vld [vmem:[%s3 + $0x60] sm:$0xff]
  %v97 = vld [vmem:[%s3 + $0x68] sm:$0xff]
  %v98 = vld [vmem:[%s3 + $0x70] sm:$0xff]
  %v99 = vld [vmem:[%s3 + $0x78] sm:$0xff]
  %v100 = vld [vmem:[%s3 + $0x80] sm:$0xff]
  %v101 = vld [vmem:[%s3 + $0x88] sm:$0xff]
  %v102 = vld [vmem:[%s3 + $0x90] sm:$0xff]
  %v103 = vld [vmem:[%s3 + $0x98] sm:$0xff]
  %v104 = vld [vmem:[%s3 + $0xa0] sm:$0xff]
  %v105 = vld [vmem:[%s3 + $0xa8] sm:$0xff]
  %v106 = vld [vmem:[%s3 + $0xb0] sm:$0xff]
  %v107 = vld [vmem:[%s3 + $0xb8] sm:$0xff]
  %v108 = vld [vmem:[%s3 + $0xc0] sm:$0xff]
  %v109 = vld [vmem:[%s3 + $0xc8] sm:$0xff]
  %v110 = vld [vmem:[%s3 + $0xd0] sm:$0xff]
  %v111 = vld [vmem:[%s3 + $0xd8] sm:$0xff]
  %v112 = vld [vmem:[%s3 + $0xe0] sm:$0xff]
  %v113 = vld [vmem:[%s3 + $0xe8] sm:$0xff]
  %v114 = vld [vmem:[%s3 + $0xf0] sm:$0xff]
  %v115 = vld [vmem:[%s3 + $0xf8] sm:$0xff]
  %v116 = vld [vmem:[%s3 + $0x100] sm:$0xff]
  %v117 = vld [vmem:[%s3 + $0x108] sm:$0xff]
  %v118 = vld [vmem:[%s3 + $0x110] sm:$0xff]
  %v119 = vld [vmem:[%s3 + $0x118] sm:$0xff]
  %v120 = vld [vmem:[%s3 + $0x120] sm:$0xff]
  %v121 = vld [vmem:[%s3 + $0x128] sm:$0xff]
  %v122 = vld [vmem:[%s3 + $0x130] sm:$0xff]
  %v123 = vld [vmem:[%s3 + $0x138] sm:$0xff]
  %v124 = vld [vmem:[%s3 + $0x140] sm:$0xff]
  %v125 = vld [vmem:[%s3 + $0x148] sm:$0xff]
  %v126 = vld [vmem:[%s3 + $0x150] sm:$0xff]
  %v127 = vld [vmem:[%s3 + $0x158] sm:$0xff]
  %v128 = vld [vmem:[%s3 + $0x160] sm:$0xff]
  %v129 = vld [vmem:[%s3 + $0x168] sm:$0xff]
  %v130 = vld [vmem:[%s3 + $0x170] sm:$0xff]
  %v131 = vld [vmem:[%s3 + $0x178] sm:$0xff]
  %v132 = vld [vmem:[%s3 + $0x180] sm:$0xff]
  %v133 = vld [vmem:[%s3 + $0x188] sm:$0xff]
  %v134 = vld [vmem:[%s3 + $0x190] sm:$0xff]
  %v135 = vld [vmem:[%s3 + $0x198] sm:$0xff]
  %v136 = vld [vmem:[%s3 + $0x1a0] sm:$0xff]
  %v137 = vld [vmem:[%s3 + $0x1a8] sm:$0xff]
  %v138 = vld [vmem:[%s3 + $0x1b0] sm:$0xff]
  %v139 = vld [vmem:[%s3 + $0x1b8] sm:$0xff]
  %v140 = vld [vmem:[%s3 + $0x1c0] sm:$0xff]
  %v141 = vld [vmem:[%s3 + $0x1c8] sm:$0xff]
  %v142 = vld [vmem:[%s3 + $0x1d0] sm:$0xff]
  %v143 = vld [vmem:[%s3 + $0x1d8] sm:$0xff]
  %v144 = vld [vmem:[%s3 + $0x1e0] sm:$0xff]
  %v145 = vld [vmem:[%s3 + $0x1e8] sm:$0xff]
  %v146 = vld [vmem:[%s3 + $0x1f0] sm:$0xff]
  %v147 = vld [vmem:[%s3 + $0x1f8] sm:$0xff]
  %v148 = vld [vmem:[%s0] sm:$0xf]
  %v149 = vld [vmem:[%s0 + $0x4] sm:$0xf]
  %v150 = vld [vmem:[%s0 + $0x8] sm:$0xf]
  %v151 = vld [vmem:[%s0 + $0xc] sm:$0xf]
  %v152 = vld [vmem:[%s0 + $0x10] sm:$0xf]
  %v153 = vld [vmem:[%s0 + $0x14] sm:$0xf]
  %v154 = vld [vmem:[%s0 + $0x18] sm:$0xf]
  %v155 = vld [vmem:[%s0 + $0x1c] sm:$0xf]
  %v156 = vld [vmem:[%s0 + $0x20] sm:$0xf]
  %v157 = vld [vmem:[%s0 + $0x24] sm:$0xf]
  %v158 = vld [vmem:[%s0 + $0x28] sm:$0xf]
  %v159 = vld [vmem:[%s0 + $0x2c] sm:$0xf]
  %v160 = vld [vmem:[%s0 + $0x30] sm:$0xf]
  %v161 = vld [vmem:[%s0 + $0x34] sm:$0xf]
  %v162 = vld [vmem:[%s0 + $0x38] sm:$0xf]
  %v163 = vld [vmem:[%s0 + $0x3c] sm:$0xf]
  %v164 = vld [vmem:[%s0 + $0x40] sm:$0xf]
  %v165 = vld [vmem:[%s0 + $0x44] sm:$0xf]
  %v166 = vld [vmem:[%s0 + $0x48] sm:$0xf]
  %v167 = vld [vmem:[%s0 + $0x4c] sm:$0xf]
  %v168 = vld [vmem:[%s0 + $0x50] sm:$0xf]
  %v169 = vld [vmem:[%s0 + $0x54] sm:$0xf]
  %v170 = vld [vmem:[%s0 + $0x58] sm:$0xf]
  %v171 = vld [vmem:[%s0 + $0x5c] sm:$0xf]
  %v172 = vld [vmem:[%s0 + $0x60] sm:$0xf]
  %v173 = vld [vmem:[%s0 + $0x64] sm:$0xf]
  %v174 = vld [vmem:[%s0 + $0x68] sm:$0xf]
  %v175 = vld [vmem:[%s0 + $0x6c] sm:$0xf]
  %v176 = vld [vmem:[%s0 + $0x70] sm:$0xf]
  %v177 = vld [vmem:[%s0 + $0x74] sm:$0xf]
  %v178 = vld [vmem:[%s0 + $0x78] sm:$0xf]
  %v179 = vld [vmem:[%s0 + $0x7c] sm:$0xf]
  %v180 = vld [vmem:[%s0 + $0x80] sm:$0xf]
  %v181 = vld [vmem:[%s0 + $0x84] sm:$0xf]
  %v182 = vld [vmem:[%s0 + $0x88] sm:$0xf]
  %v183 = vld [vmem:[%s0 + $0x8c] sm:$0xf]
  %v184 = vld [vmem:[%s0 + $0x90] sm:$0xf]
  %v185 = vld [vmem:[%s0 + $0x94] sm:$0xf]
  %v186 = vld [vmem:[%s0 + $0x98] sm:$0xf]
  %v187 = vld [vmem:[%s0 + $0x9c] sm:$0xf]
  %v188 = vld [vmem:[%s0 + $0xa0] sm:$0xf]
  %v189 = vld [vmem:[%s0 + $0xa4] sm:$0xf]
  %v190 = vld [vmem:[%s0 + $0xa8] sm:$0xf]
  %v191 = vld [vmem:[%s0 + $0xac] sm:$0xf]
  %v192 = vld [vmem:[%s0 + $0xb0] sm:$0xf]
  %v193 = vld [vmem:[%s0 + $0xb4] sm:$0xf]
  %v194 = vld [vmem:[%s0 + $0xb8] sm:$0xf]
  %v195 = vld [vmem:[%s0 + $0xbc] sm:$0xf]
  %v196 = vld [vmem:[%s0 + $0xc0] sm:$0xf]
  %v197 = vld [vmem:[%s0 + $0xc4] sm:$0xf]
  %v198 = vld [vmem:[%s0 + $0xc8] sm:$0xf]
  %v199 = vld [vmem:[%s0 + $0xcc] sm:$0xf]
  %v200 = vld [vmem:[%s0 + $0xd0] sm:$0xf]
  %v201 = vld [vmem:[%s0 + $0xd4] sm:$0xf]
  %v202 = vld [vmem:[%s0 + $0xd8] sm:$0xf]
  %v203 = vld [vmem:[%s0 + $0xdc] sm:$0xf]
  %v204 = vld [vmem:[%s0 + $0xe0] sm:$0xf]
  %v205 = vld [vmem:[%s0 + $0xe4] sm:$0xf]
  %v206 = vld [vmem:[%s0 + $0xe8] sm:$0xf]
  %v207 = vld [vmem:[%s0 + $0xec] sm:$0xf]
  %v208 = vld [vmem:[%s0 + $0xf0] sm:$0xf]
  %v209 = vld [vmem:[%s0 + $0xf4] sm:$0xf]
  %v210 = vld [vmem:[%s0 + $0xf8] sm:$0xf]
  %v211 = vld [vmem:[%s0 + $0xfc] sm:$0xf]
  %v212 = vld [vmem:[%s1] sm:$0xf]
  %v213 = vld [vmem:[%s1 + $0x4] sm:$0xf]
  %v214 = vld [vmem:[%s1 + $0x8] sm:$0xf]
  %v215 = vld [vmem:[%s1 + $0xc] sm:$0x3]
  %v280 = vunpack.c.l.b16 %v148
  %v281 = vunpack.c.l.b16 %v149
  %v282 = vunpack.c.l.b16 %v150
  %v283 = vunpack.c.l.b16 %v151
  %v284 = vunpack.c.l.b16 %v152
  %v285 = vunpack.c.l.b16 %v153
  %v286 = vunpack.c.l.b16 %v154
  %v287 = vunpack.c.l.b16 %v155
  %v288 = vunpack.c.l.b16 %v156
  %v289 = vunpack.c.l.b16 %v157
  %v290 = vunpack.c.l.b16 %v158
  %v291 = vunpack.c.l.b16 %v159
  %v292 = vunpack.c.l.b16 %v160
  %v293 = vunpack.c.l.b16 %v161
  %v294 = vunpack.c.l.b16 %v162
  %v295 = vunpack.c.l.b16 %v163
  %v296 = vunpack.c.l.b16 %v164
  %v297 = vunpack.c.l.b16 %v165
  %v298 = vunpack.c.l.b16 %v166
  %v299 = vunpack.c.l.b16 %v167
  %v300 = vunpack.c.l.b16 %v168
  %v301 = vunpack.c.l.b16 %v169
  %v302 = vunpack.c.l.b16 %v170
  %v303 = vunpack.c.l.b16 %v171
  %v304 = vunpack.c.l.b16 %v172
  %v305 = vunpack.c.l.b16 %v173
  %v306 = vunpack.c.l.b16 %v174
  %v307 = vunpack.c.l.b16 %v175
  %v308 = vunpack.c.l.b16 %v176
  %v309 = vunpack.c.l.b16 %v177
  %v310 = vunpack.c.l.b16 %v178
  %v311 = vunpack.c.l.b16 %v179
  %v312 = vunpack.c.l.b16 %v180
  %v313 = vunpack.c.l.b16 %v181
  %v314 = vunpack.c.l.b16 %v182
  %v315 = vunpack.c.l.b16 %v183
  %v316 = vunpack.c.l.b16 %v184
  %v317 = vunpack.c.l.b16 %v185
  %v318 = vunpack.c.l.b16 %v186
  %v319 = vunpack.c.l.b16 %v187
  %v320 = vunpack.c.l.b16 %v188
  %v321 = vunpack.c.l.b16 %v189
  %v322 = vunpack.c.l.b16 %v190
  %v323 = vunpack.c.l.b16 %v191
  %v324 = vunpack.c.l.b16 %v192
  %v325 = vunpack.c.l.b16 %v193
  %v326 = vunpack.c.l.b16 %v194
  %v327 = vunpack.c.l.b16 %v195
  %v328 = vunpack.c.l.b16 %v196
  %v329 = vunpack.c.l.b16 %v197
  %v330 = vunpack.c.l.b16 %v198
  %v331 = vunpack.c.l.b16 %v199
  %v332 = vunpack.c.l.b16 %v200
  %v333 = vunpack.c.l.b16 %v201
  %v334 = vunpack.c.l.b16 %v202
  %v335 = vunpack.c.l.b16 %v203
  %v336 = vunpack.c.l.b16 %v204
  %v337 = vunpack.c.l.b16 %v205
  %v338 = vunpack.c.l.b16 %v206
  %v339 = vunpack.c.l.b16 %v207
  %v340 = vunpack.c.l.b16 %v208
  %v341 = vunpack.c.l.b16 %v209
  %v342 = vunpack.c.l.b16 %v210
  %v343 = vunpack.c.l.b16 %v211
  %v344 = vpack.c.b16 %v281, %v280
  %v345 = vpack.c.b16 %v283, %v282
  %v346 = vpack.c.b16 %v285, %v284
  %v347 = vpack.c.b16 %v287, %v286
  %v348 = vpack.c.b16 %v289, %v288
  %v349 = vpack.c.b16 %v291, %v290
  %v350 = vpack.c.b16 %v293, %v292
  %v351 = vpack.c.b16 %v295, %v294
  %v352 = vpack.c.b16 %v297, %v296
  %v353 = vpack.c.b16 %v299, %v298
  %v354 = vpack.c.b16 %v301, %v300
  %v355 = vpack.c.b16 %v303, %v302
  %v356 = vpack.c.b16 %v305, %v304
  %v357 = vpack.c.b16 %v307, %v306
  %v358 = vpack.c.b16 %v309, %v308
  %v359 = vpack.c.b16 %v311, %v310
  %v360 = vpack.c.b16 %v313, %v312
  %v361 = vpack.c.b16 %v315, %v314
  %v362 = vpack.c.b16 %v317, %v316
  %v363 = vpack.c.b16 %v319, %v318
  %v364 = vpack.c.b16 %v321, %v320
  %v365 = vpack.c.b16 %v323, %v322
  %v366 = vpack.c.b16 %v325, %v324
  %v367 = vpack.c.b16 %v327, %v326
  %v368 = vpack.c.b16 %v329, %v328
  %v369 = vpack.c.b16 %v331, %v330
  %v370 = vpack.c.b16 %v333, %v332
  %v371 = vpack.c.b16 %v335, %v334
  %v372 = vpack.c.b16 %v337, %v336
  %v373 = vpack.c.b16 %v339, %v338
  %v374 = vpack.c.b16 %v341, %v340
  %v375 = vpack.c.b16 %v343, %v342
  %v380 = vunpack.c.l.b16 %v212
  %v381 = vunpack.c.l.b16 %v213
  %v382 = vunpack.c.l.b16 %v214
  %v383 = vunpack.c.l.b16 %v215
  %v384 = vpack.c.b16 %v381, %v380
  %v385 = vpack.c.b16 %v383, %v382
  %vm387 = vcmask 220160
  %v389 = vsel %vm387, %v344, 0
  %v392 = vsel %vm387, %v345, 0
  %v395 = vsel %vm387, %v346, 0
  %v398 = vsel %vm387, %v347, 0
  %v401 = vsel %vm387, %v348, 0
  %v404 = vsel %vm387, %v349, 0
  %v407 = vsel %vm387, %v350, 0
  %v410 = vsel %vm387, %v351, 0
  %v413 = vsel %vm387, %v352, 0
  %v416 = vsel %vm387, %v353, 0
  %v419 = vsel %vm387, %v354, 0
  %v422 = vsel %vm387, %v355, 0
  %v425 = vsel %vm387, %v356, 0
  %v428 = vsel %vm387, %v357, 0
  %v431 = vsel %vm387, %v358, 0
  %v434 = vsel %vm387, %v359, 0
  %v437 = vsel %vm387, %v360, 0
  %v440 = vsel %vm387, %v361, 0
  %v443 = vsel %vm387, %v362, 0
  %v446 = vsel %vm387, %v363, 0
  %v449 = vsel %vm387, %v364, 0
  %v452 = vsel %vm387, %v365, 0
  %v455 = vsel %vm387, %v366, 0
  %v458 = vsel %vm387, %v367, 0
  %v461 = vsel %vm387, %v368, 0
  %v464 = vsel %vm387, %v369, 0
  %v467 = vsel %vm387, %v370, 0
  %v470 = vsel %vm387, %v371, 0
  %v473 = vsel %vm387, %v372, 0
  %v476 = vsel %vm387, %v373, 0
  %v479 = vsel %vm387, %v374, 0
  %v482 = vsel %vm387, %v375, 0
  %vm484 = vcmask 1044480
  %vm485 = vcmask 1045504
  %v486 = vsel %vm484, 4294967295, 65535
  %v487 = vsel %vm485, %v486, 0
  %v489 = vand.u32 %v385, %v487
  %491 = vmatpush.bf16.msra.mxu0 0
  %492 = vmatpush.bf16.msra.mxu0 0
  %493 = vmatpush.bf16.msra.mxu0 0
  %494 = vmatpush.bf16.msra.mxu0 0
  %495 = vmatpush.bf16.msra.mxu0 0
  %496 = vmatpush.bf16.msra.mxu0 0
  %497 = vmatpush.bf16.msra.mxu0 %v489
  %498 = vmatpush.bf16.msra.mxu0 %v384
  %499 = vmatmul.bf16.gmra.mxu0 %v389
  %v500 = vpop.f32.mrf.mxu0
  %v501 = vadd.f32 0.0, %v500
  %v502 = vpop.f32.mrf.mxu0
  %v503 = vadd.f32 0.0, %v502
  %504 = vmatmul.bf16.gmra.mxu0 %v392
  %v505 = vpop.f32.mrf.mxu0
  %v506 = vadd.f32 0.0, %v505
  %v507 = vpop.f32.mrf.mxu0
  %v508 = vadd.f32 0.0, %v507
  %509 = vmatmul.bf16.gmra.mxu0 %v395
  %v510 = vpop.f32.mrf.mxu0
  %v511 = vadd.f32 0.0, %v510
  %v512 = vpop.f32.mrf.mxu0
  %v513 = vadd.f32 0.0, %v512
  %514 = vmatmul.bf16.gmra.mxu0 %v398
  %v515 = vpop.f32.mrf.mxu0
  %v516 = vadd.f32 0.0, %v515
  %v517 = vpop.f32.mrf.mxu0
  %v518 = vadd.f32 0.0, %v517
  %519 = vmatmul.bf16.gmra.mxu0 %v401
  %v520 = vpop.f32.mrf.mxu0
  %v521 = vadd.f32 0.0, %v520
  %v522 = vpop.f32.mrf.mxu0
  %v523 = vadd.f32 0.0, %v522
  %524 = vmatmul.bf16.gmra.mxu0 %v404
  %v525 = vpop.f32.mrf.mxu0
  %v526 = vadd.f32 0.0, %v525
  %v527 = vpop.f32.mrf.mxu0
  %v528 = vadd.f32 0.0, %v527
  %529 = vmatmul.bf16.gmra.mxu0 %v407
  %v530 = vpop.f32.mrf.mxu0
  %v531 = vadd.f32 0.0, %v530
  %v532 = vpop.f32.mrf.mxu0
  %v533 = vadd.f32 0.0, %v532
  %534 = vmatmul.bf16.gmra.mxu0 %v410
  %v535 = vpop.f32.mrf.mxu0
  %v536 = vadd.f32 0.0, %v535
  %v537 = vpop.f32.mrf.mxu0
  %v538 = vadd.f32 0.0, %v537
  %539 = vmatmul.bf16.gmra.mxu0 %v413
  %v540 = vpop.f32.mrf.mxu0
  %v541 = vadd.f32 0.0, %v540
  %v542 = vpop.f32.mrf.mxu0
  %v543 = vadd.f32 0.0, %v542
  %544 = vmatmul.bf16.gmra.mxu0 %v416
  %v545 = vpop.f32.mrf.mxu0
  %v546 = vadd.f32 0.0, %v545
  %v547 = vpop.f32.mrf.mxu0
  %v548 = vadd.f32 0.0, %v547
  %549 = vmatmul.bf16.gmra.mxu0 %v419
  %v550 = vpop.f32.mrf.mxu0
  %v551 = vadd.f32 0.0, %v550
  %v552 = vpop.f32.mrf.mxu0
  %v553 = vadd.f32 0.0, %v552
  %554 = vmatmul.bf16.gmra.mxu0 %v422
  %v555 = vpop.f32.mrf.mxu0
  %v556 = vadd.f32 0.0, %v555
  %v557 = vpop.f32.mrf.mxu0
  %v558 = vadd.f32 0.0, %v557
  %559 = vmatmul.bf16.gmra.mxu0 %v425
  %v560 = vpop.f32.mrf.mxu0
  %v561 = vadd.f32 0.0, %v560
  %v562 = vpop.f32.mrf.mxu0
  %v563 = vadd.f32 0.0, %v562
  %564 = vmatmul.bf16.gmra.mxu0 %v428
  %v565 = vpop.f32.mrf.mxu0
  %v566 = vadd.f32 0.0, %v565
  %v567 = vpop.f32.mrf.mxu0
  %v568 = vadd.f32 0.0, %v567
  %569 = vmatmul.bf16.gmra.mxu0 %v431
  %v570 = vpop.f32.mrf.mxu0
  %v571 = vadd.f32 0.0, %v570
  %v572 = vpop.f32.mrf.mxu0
  %v573 = vadd.f32 0.0, %v572
  %574 = vmatmul.bf16.gmra.mxu0 %v434
  %v575 = vpop.f32.mrf.mxu0
  %v576 = vadd.f32 0.0, %v575
  %v577 = vpop.f32.mrf.mxu0
  %v578 = vadd.f32 0.0, %v577
  %579 = vmatmul.bf16.gmra.mxu0 %v437
  %v580 = vpop.f32.mrf.mxu0
  %v581 = vadd.f32 0.0, %v580
  %v582 = vpop.f32.mrf.mxu0
  %v583 = vadd.f32 0.0, %v582
  %584 = vmatmul.bf16.gmra.mxu0 %v440
  %v585 = vpop.f32.mrf.mxu0
  %v586 = vadd.f32 0.0, %v585
  %v587 = vpop.f32.mrf.mxu0
  %v588 = vadd.f32 0.0, %v587
  %589 = vmatmul.bf16.gmra.mxu0 %v443
  %v590 = vpop.f32.mrf.mxu0
  %v591 = vadd.f32 0.0, %v590
  %v592 = vpop.f32.mrf.mxu0
  %v593 = vadd.f32 0.0, %v592
  %594 = vmatmul.bf16.gmra.mxu0 %v446
  %v595 = vpop.f32.mrf.mxu0
  %v596 = vadd.f32 0.0, %v595
  %v597 = vpop.f32.mrf.mxu0
  %v598 = vadd.f32 0.0, %v597
  %599 = vmatmul.bf16.gmra.mxu0 %v449
  %v600 = vpop.f32.mrf.mxu0
  %v601 = vadd.f32 0.0, %v600
  %v602 = vpop.f32.mrf.mxu0
  %v603 = vadd.f32 0.0, %v602
  %604 = vmatmul.bf16.gmra.mxu0 %v452
  %v605 = vpop.f32.mrf.mxu0
  %v606 = vadd.f32 0.0, %v605
  %v607 = vpop.f32.mrf.mxu0
  %v608 = vadd.f32 0.0, %v607
  %609 = vmatmul.bf16.gmra.mxu0 %v455
  %v610 = vpop.f32.mrf.mxu0
  %v611 = vadd.f32 0.0, %v610
  %v612 = vpop.f32.mrf.mxu0
  %v613 = vadd.f32 0.0, %v612
  %614 = vmatmul.bf16.gmra.mxu0 %v458
  %v615 = vpop.f32.mrf.mxu0
  %v616 = vadd.f32 0.0, %v615
  %v617 = vpop.f32.mrf.mxu0
  %v618 = vadd.f32 0.0, %v617
  %619 = vmatmul.bf16.gmra.mxu0 %v461
  %v620 = vpop.f32.mrf.mxu0
  %v621 = vadd.f32 0.0, %v620
  %v622 = vpop.f32.mrf.mxu0
  %v623 = vadd.f32 0.0, %v622
  %624 = vmatmul.bf16.gmra.mxu0 %v464
  %v625 = vpop.f32.mrf.mxu0
  %v626 = vadd.f32 0.0, %v625
  %v627 = vpop.f32.mrf.mxu0
  %v628 = vadd.f32 0.0, %v627
  %629 = vmatmul.bf16.gmra.mxu0 %v467
  %v630 = vpop.f32.mrf.mxu0
  %v631 = vadd.f32 0.0, %v630
  %v632 = vpop.f32.mrf.mxu0
  %v633 = vadd.f32 0.0, %v632
  %634 = vmatmul.bf16.gmra.mxu0 %v470
  %v635 = vpop.f32.mrf.mxu0
  %v636 = vadd.f32 0.0, %v635
  %v637 = vpop.f32.mrf.mxu0
  %v638 = vadd.f32 0.0, %v637
  %639 = vmatmul.bf16.gmra.mxu0 %v473
  %v640 = vpop.f32.mrf.mxu0
  %v641 = vadd.f32 0.0, %v640
  %v642 = vpop.f32.mrf.mxu0
  %v643 = vadd.f32 0.0, %v642
  %644 = vmatmul.bf16.gmra.mxu0 %v476
  %v645 = vpop.f32.mrf.mxu0
  %v646 = vadd.f32 0.0, %v645
  %v647 = vpop.f32.mrf.mxu0
  %v648 = vadd.f32 0.0, %v647
  %649 = vmatmul.bf16.gmra.mxu0 %v479
  %v650 = vpop.f32.mrf.mxu0
  %v651 = vadd.f32 0.0, %v650
  %v652 = vpop.f32.mrf.mxu0
  %v653 = vadd.f32 0.0, %v652
  %654 = vmatmul.bf16.gmra.mxu0 %v482
  %v655 = vpop.f32.mrf.mxu0
  %v656 = vadd.f32 0.0, %v655
  %v657 = vpop.f32.mrf.mxu0
  %v658 = vadd.f32 0.0, %v657
  %659 = vdwg.mxu0
  %v660 = vadd.f32 %v84, %v501
  %v661 = vadd.f32 %v85, %v503
  %v662 = vadd.f32 %v86, %v506
  %v663 = vadd.f32 %v87, %v508
  %v664 = vadd.f32 %v88, %v511
  %v665 = vadd.f32 %v89, %v513
  %v666 = vadd.f32 %v90, %v516
  %v667 = vadd.f32 %v91, %v518
  %v668 = vadd.f32 %v92, %v521
  %v669 = vadd.f32 %v93, %v523
  %v670 = vadd.f32 %v94, %v526
  %v671 = vadd.f32 %v95, %v528
  %v672 = vadd.f32 %v96, %v531
  %v673 = vadd.f32 %v97, %v533
  %v674 = vadd.f32 %v98, %v536
  %v675 = vadd.f32 %v99, %v538
  %v676 = vadd.f32 %v100, %v541
  %v677 = vadd.f32 %v101, %v543
  %v678 = vadd.f32 %v102, %v546
  %v679 = vadd.f32 %v103, %v548
  %v680 = vadd.f32 %v104, %v551
  %v681 = vadd.f32 %v105, %v553
  %v682 = vadd.f32 %v106, %v556
  %v683 = vadd.f32 %v107, %v558
  %v684 = vadd.f32 %v108, %v561
  %v685 = vadd.f32 %v109, %v563
  %v686 = vadd.f32 %v110, %v566
  %v687 = vadd.f32 %v111, %v568
  %v688 = vadd.f32 %v112, %v571
  %v689 = vadd.f32 %v113, %v573
  %v690 = vadd.f32 %v114, %v576
  %v691 = vadd.f32 %v115, %v578
  %v692 = vadd.f32 %v116, %v581
  %v693 = vadd.f32 %v117, %v583
  %v694 = vadd.f32 %v118, %v586
  %v695 = vadd.f32 %v119, %v588
  %v696 = vadd.f32 %v120, %v591
  %v697 = vadd.f32 %v121, %v593
  %v698 = vadd.f32 %v122, %v596
  %v699 = vadd.f32 %v123, %v598
  %v700 = vadd.f32 %v124, %v601
  %v701 = vadd.f32 %v125, %v603
  %v702 = vadd.f32 %v126, %v606
  %v703 = vadd.f32 %v127, %v608
  %v704 = vadd.f32 %v128, %v611
  %v705 = vadd.f32 %v129, %v613
  %v706 = vadd.f32 %v130, %v616
  %v707 = vadd.f32 %v131, %v618
  %v708 = vadd.f32 %v132, %v621
  %v709 = vadd.f32 %v133, %v623
  %v710 = vadd.f32 %v134, %v626
  %v711 = vadd.f32 %v135, %v628
  %v712 = vadd.f32 %v136, %v631
  %v713 = vadd.f32 %v137, %v633
  %v714 = vadd.f32 %v138, %v636
  %v715 = vadd.f32 %v139, %v638
  %v716 = vadd.f32 %v140, %v641
  %v717 = vadd.f32 %v141, %v643
  %v718 = vadd.f32 %v142, %v646
  %v719 = vadd.f32 %v143, %v648
  %v720 = vadd.f32 %v144, %v651
  %v721 = vadd.f32 %v145, %v653
  %v722 = vadd.f32 %v146, %v656
  %v723 = vadd.f32 %v147, %v658
  %vm724 = vcmask 523264
  %725 = vst.msk [vmem:[%s3] sm:$0xff] %vm724, %v660
  %726 = vst.msk [vmem:[%s3 + $0x8] sm:$0xff] %vm724, %v661
  %727 = vst.msk [vmem:[%s3 + $0x10] sm:$0xff] %vm724, %v662
  %728 = vst.msk [vmem:[%s3 + $0x18] sm:$0xff] %vm724, %v663
  %729 = vst.msk [vmem:[%s3 + $0x20] sm:$0xff] %vm724, %v664
  %730 = vst.msk [vmem:[%s3 + $0x28] sm:$0xff] %vm724, %v665
  %731 = vst.msk [vmem:[%s3 + $0x30] sm:$0xff] %vm724, %v666
  %732 = vst.msk [vmem:[%s3 + $0x38] sm:$0xff] %vm724, %v667
  %733 = vst.msk [vmem:[%s3 + $0x40] sm:$0xff] %vm724, %v668
  %734 = vst.msk [vmem:[%s3 + $0x48] sm:$0xff] %vm724, %v669
  %735 = vst.msk [vmem:[%s3 + $0x50] sm:$0xff] %vm724, %v670
  %736 = vst.msk [vmem:[%s3 + $0x58] sm:$0xff] %vm724, %v671
  %737 = vst.msk [vmem:[%s3 + $0x60] sm:$0xff] %vm724, %v672
  %738 = vst.msk [vmem:[%s3 + $0x68] sm:$0xff] %vm724, %v673
  %739 = vst.msk [vmem:[%s3 + $0x70] sm:$0xff] %vm724, %v674
  %740 = vst.msk [vmem:[%s3 + $0x78] sm:$0xff] %vm724, %v675
  %741 = vst.msk [vmem:[%s3 + $0x80] sm:$0xff] %vm724, %v676
  %742 = vst.msk [vmem:[%s3 + $0x88] sm:$0xff] %vm724, %v677
  %743 = vst.msk [vmem:[%s3 + $0x90] sm:$0xff] %vm724, %v678
  %744 = vst.msk [vmem:[%s3 + $0x98] sm:$0xff] %vm724, %v679
  %745 = vst.msk [vmem:[%s3 + $0xa0] sm:$0xff] %vm724, %v680
  %746 = vst.msk [vmem:[%s3 + $0xa8] sm:$0xff] %vm724, %v681
  %747 = vst.msk [vmem:[%s3 + $0xb0] sm:$0xff] %vm724, %v682
  %748 = vst.msk [vmem:[%s3 + $0xb8] sm:$0xff] %vm724, %v683
  %749 = vst.msk [vmem:[%s3 + $0xc0] sm:$0xff] %vm724, %v684
  %750 = vst.msk [vmem:[%s3 + $0xc8] sm:$0xff] %vm724, %v685
  %751 = vst.msk [vmem:[%s3 + $0xd0] sm:$0xff] %vm724, %v686
  %752 = vst.msk [vmem:[%s3 + $0xd8] sm:$0xff] %vm724, %v687
  %753 = vst.msk [vmem:[%s3 + $0xe0] sm:$0xff] %vm724, %v688
  %754 = vst.msk [vmem:[%s3 + $0xe8] sm:$0xff] %vm724, %v689
  %755 = vst.msk [vmem:[%s3 + $0xf0] sm:$0xff] %vm724, %v690
  %756 = vst.msk [vmem:[%s3 + $0xf8] sm:$0xff] %vm724, %v691
  %757 = vst.msk [vmem:[%s3 + $0x100] sm:$0xff] %vm724, %v692
  %758 = vst.msk [vmem:[%s3 + $0x108] sm:$0xff] %vm724, %v693
  %759 = vst.msk [vmem:[%s3 + $0x110] sm:$0xff] %vm724, %v694
  %760 = vst.msk [vmem:[%s3 + $0x118] sm:$0xff] %vm724, %v695
  %761 = vst.msk [vmem:[%s3 + $0x120] sm:$0xff] %vm724, %v696
  %762 = vst.msk [vmem:[%s3 + $0x128] sm:$0xff] %vm724, %v697
  %763 = vst.msk [vmem:[%s3 + $0x130] sm:$0xff] %vm724, %v698
  %764 = vst.msk [vmem:[%s3 + $0x138] sm:$0xff] %vm724, %v699
  %765 = vst.msk [vmem:[%s3 + $0x140] sm:$0xff] %vm724, %v700
  %766 = vst.msk [vmem:[%s3 + $0x148] sm:$0xff] %vm724, %v701
  %767 = vst.msk [vmem:[%s3 + $0x150] sm:$0xff] %vm724, %v702
  %768 = vst.msk [vmem:[%s3 + $0x158] sm:$0xff] %vm724, %v703
  %769 = vst.msk [vmem:[%s3 + $0x160] sm:$0xff] %vm724, %v704
  %770 = vst.msk [vmem:[%s3 + $0x168] sm:$0xff] %vm724, %v705
  %771 = vst.msk [vmem:[%s3 + $0x170] sm:$0xff] %vm724, %v706
  %772 = vst.msk [vmem:[%s3 + $0x178] sm:$0xff] %vm724, %v707
  %773 = vst.msk [vmem:[%s3 + $0x180] sm:$0xff] %vm724, %v708
  %774 = vst.msk [vmem:[%s3 + $0x188] sm:$0xff] %vm724, %v709
  %775 = vst.msk [vmem:[%s3 + $0x190] sm:$0xff] %vm724, %v710
  %776 = vst.msk [vmem:[%s3 + $0x198] sm:$0xff] %vm724, %v711
  %777 = vst.msk [vmem:[%s3 + $0x1a0] sm:$0xff] %vm724, %v712
  %778 = vst.msk [vmem:[%s3 + $0x1a8] sm:$0xff] %vm724, %v713
  %779 = vst.msk [vmem:[%s3 + $0x1b0] sm:$0xff] %vm724, %v714
  %780 = vst.msk [vmem:[%s3 + $0x1b8] sm:$0xff] %vm724, %v715
  %781 = vst.msk [vmem:[%s3 + $0x1c0] sm:$0xff] %vm724, %v716
  %782 = vst.msk [vmem:[%s3 + $0x1c8] sm:$0xff] %vm724, %v717
  %783 = vst.msk [vmem:[%s3 + $0x1d0] sm:$0xff] %vm724, %v718
  %784 = vst.msk [vmem:[%s3 + $0x1d8] sm:$0xff] %vm724, %v719
  %785 = vst.msk [vmem:[%s3 + $0x1e0] sm:$0xff] %vm724, %v720
  %786 = vst.msk [vmem:[%s3 + $0x1e8] sm:$0xff] %vm724, %v721
  %787 = vst.msk [vmem:[%s3 + $0x1f0] sm:$0xff] %vm724, %v722
  %788 = vst.msk [vmem:[%s3 + $0x1f8] sm:$0xff] %vm724, %v723
  // Predicated region
  $region18: #{tpu_custom_call.1} parent=0 // pred_check
    %p789 = pneg %p15
  $region19: #{tpu_custom_call.1} parent=0 // pred_check_branch
    %791 = sbr.rel (%p789) target = $region21
  $region20: #{tpu_custom_call.1} parent=0 // pred_region
    %v792 = vld [vmem:[%s3] sm:$0xff]
    %v793 = vld [vmem:[%s3 + $0x8] sm:$0xff]
    %v794 = vld [vmem:[%s3 + $0x10] sm:$0xff]
    %v795 = vld [vmem:[%s3 + $0x18] sm:$0xff]
    %v796 = vld [vmem:[%s3 + $0x20] sm:$0xff]
    %v797 = vld [vmem:[%s3 + $0x28] sm:$0xff]
    %v798 = vld [vmem:[%s3 + $0x30] sm:$0xff]
    %v799 = vld [vmem:[%s3 + $0x38] sm:$0xff]
    %v800 = vld [vmem:[%s3 + $0x40] sm:$0xff]
    %v801 = vld [vmem:[%s3 + $0x48] sm:$0xff]
    %v802 = vld [vmem:[%s3 + $0x50] sm:$0xff]
    %v803 = vld [vmem:[%s3 + $0x58] sm:$0xff]
    %v804 = vld [vmem:[%s3 + $0x60] sm:$0xff]
    %v805 = vld [vmem:[%s3 + $0x68] sm:$0xff]
    %v806 = vld [vmem:[%s3 + $0x70] sm:$0xff]
    %v807 = vld [vmem:[%s3 + $0x78] sm:$0xff]
    %v808 = vld [vmem:[%s3 + $0x80] sm:$0xff]
    %v809 = vld [vmem:[%s3 + $0x88] sm:$0xff]
    %v810 = vld [vmem:[%s3 + $0x90] sm:$0xff]
    %v811 = vld [vmem:[%s3 + $0x98] sm:$0xff]
    %v812 = vld [vmem:[%s3 + $0xa0] sm:$0xff]
    %v813 = vld [vmem:[%s3 + $0xa8] sm:$0xff]
    %v814 = vld [vmem:[%s3 + $0xb0] sm:$0xff]
    %v815 = vld [vmem:[%s3 + $0xb8] sm:$0xff]
    %v816 = vld [vmem:[%s3 + $0xc0] sm:$0xff]
    %v817 = vld [vmem:[%s3 + $0xc8] sm:$0xff]
    %v818 = vld [vmem:[%s3 + $0xd0] sm:$0xff]
    %v819 = vld [vmem:[%s3 + $0xd8] sm:$0xff]
    %v820 = vld [vmem:[%s3 + $0xe0] sm:$0xff]
    %v821 = vld [vmem:[%s3 + $0xe8] sm:$0xff]
    %v822 = vld [vmem:[%s3 + $0xf0] sm:$0xff]
    %v823 = vld [vmem:[%s3 + $0xf8] sm:$0xff]
    %v824 = vld [vmem:[%s3 + $0x100] sm:$0xff]
    %v825 = vld [vmem:[%s3 + $0x108] sm:$0xff]
    %v826 = vld [vmem:[%s3 + $0x110] sm:$0xff]
    %v827 = vld [vmem:[%s3 + $0x118] sm:$0xff]
    %v828 = vld [vmem:[%s3 + $0x120] sm:$0xff]
    %v829 = vld [vmem:[%s3 + $0x128] sm:$0xff]
    %v830 = vld [vmem:[%s3 + $0x130] sm:$0xff]
    %v831 = vld [vmem:[%s3 + $0x138] sm:$0xff]
    %v832 = vld [vmem:[%s3 + $0x140] sm:$0xff]
    %v833 = vld [vmem:[%s3 + $0x148] sm:$0xff]
    %v834 = vld [vmem:[%s3 + $0x150] sm:$0xff]
    %v835 = vld [vmem:[%s3 + $0x158] sm:$0xff]
    %v836 = vld [vmem:[%s3 + $0x160] sm:$0xff]
    %v837 = vld [vmem:[%s3 + $0x168] sm:$0xff]
    %v838 = vld [vmem:[%s3 + $0x170] sm:$0xff]
    %v839 = vld [vmem:[%s3 + $0x178] sm:$0xff]
    %v840 = vld [vmem:[%s3 + $0x180] sm:$0xff]
    %v841 = vld [vmem:[%s3 + $0x188] sm:$0xff]
    %v842 = vld [vmem:[%s3 + $0x190] sm:$0xff]
    %v843 = vld [vmem:[%s3 + $0x198] sm:$0xff]
    %v844 = vld [vmem:[%s3 + $0x1a0] sm:$0xff]
    %v845 = vld [vmem:[%s3 + $0x1a8] sm:$0xff]
    %v846 = vld [vmem:[%s3 + $0x1b0] sm:$0xff]
    %v847 = vld [vmem:[%s3 + $0x1b8] sm:$0xff]
    %v848 = vld [vmem:[%s3 + $0x1c0] sm:$0xff]
    %v849 = vld [vmem:[%s3 + $0x1c8] sm:$0xff]
    %v850 = vld [vmem:[%s3 + $0x1d0] sm:$0xff]
    %v851 = vld [vmem:[%s3 + $0x1d8] sm:$0xff]
    %v852 = vld [vmem:[%s3 + $0x1e0] sm:$0xff]
    %v853 = vld [vmem:[%s3 + $0x1e8] sm:$0xff]
    %v854 = vld [vmem:[%s3 + $0x1f0] sm:$0xff]
    %v855 = vld [vmem:[%s3 + $0x1f8] sm:$0xff]
    %v856 = vld [vmem:[%s2] sm:$0x1]
    %v858 = vperm.slane %v856, 0
    %v860 = vadd.f32 %v792, %v858
    %v861 = vadd.f32 %v793, %v858
    %v862 = vadd.f32 %v794, %v858
    %v863 = vadd.f32 %v795, %v858
    %v864 = vadd.f32 %v796, %v858
    %v865 = vadd.f32 %v797, %v858
    %v866 = vadd.f32 %v798, %v858
    %v867 = vadd.f32 %v799, %v858
    %v868 = vadd.f32 %v800, %v858
    %v869 = vadd.f32 %v801, %v858
    %v870 = vadd.f32 %v802, %v858
    %v871 = vadd.f32 %v803, %v858
    %v872 = vadd.f32 %v804, %v858
    %v873 = vadd.f32 %v805, %v858
    %v874 = vadd.f32 %v806, %v858
    %v875 = vadd.f32 %v807, %v858
    %v876 = vadd.f32 %v808, %v858
    %v877 = vadd.f32 %v809, %v858
    %v878 = vadd.f32 %v810, %v858
    %v879 = vadd.f32 %v811, %v858
    %v880 = vadd.f32 %v812, %v858
    %v881 = vadd.f32 %v813, %v858
    %v882 = vadd.f32 %v814, %v858
    %v883 = vadd.f32 %v815, %v858
    %v884 = vadd.f32 %v816, %v858
    %v885 = vadd.f32 %v817, %v858
    %v886 = vadd.f32 %v818, %v858
    %v887 = vadd.f32 %v819, %v858
    %v888 = vadd.f32 %v820, %v858
    %v889 = vadd.f32 %v821, %v858
    %v890 = vadd.f32 %v822, %v858
    %v891 = vadd.f32 %v823, %v858
    %v892 = vadd.f32 %v824, %v858
    %v893 = vadd.f32 %v825, %v858
    %v894 = vadd.f32 %v826, %v858
    %v895 = vadd.f32 %v827, %v858
    %v896 = vadd.f32 %v828, %v858
    %v897 = vadd.f32 %v829, %v858
    %v898 = vadd.f32 %v830, %v858
    %v899 = vadd.f32 %v831, %v858
    %v900 = vadd.f32 %v832, %v858
    %v901 = vadd.f32 %v833, %v858
    %v902 = vadd.f32 %v834, %v858
    %v903 = vadd.f32 %v835, %v858
    %v904 = vadd.f32 %v836, %v858
    %v905 = vadd.f32 %v837, %v858
    %v906 = vadd.f32 %v838, %v858
    %v907 = vadd.f32 %v839, %v858
    %v908 = vadd.f32 %v840, %v858
    %v909 = vadd.f32 %v841, %v858
    %v910 = vadd.f32 %v842, %v858
    %v911 = vadd.f32 %v843, %v858
    %v912 = vadd.f32 %v844, %v858
    %v913 = vadd.f32 %v845, %v858
    %v914 = vadd.f32 %v846, %v858
    %v915 = vadd.f32 %v847, %v858
    %v916 = vadd.f32 %v848, %v858
    %v917 = vadd.f32 %v849, %v858
    %v918 = vadd.f32 %v850, %v858
    %v919 = vadd.f32 %v851, %v858
    %v920 = vadd.f32 %v852, %v858
    %v921 = vadd.f32 %v853, %v858
    %v922 = vadd.f32 %v854, %v858
    %v923 = vadd.f32 %v855, %v858
    %v924 = vmax.f32 %v860, 0.0
    %v925 = vmax.f32 %v861, 0.0
    %v926 = vmax.f32 %v862, 0.0
    %v927 = vmax.f32 %v863, 0.0
    %v928 = vmax.f32 %v864, 0.0
    %v929 = vmax.f32 %v865, 0.0
    %v930 = vmax.f32 %v866, 0.0
    %v931 = vmax.f32 %v867, 0.0
    %v932 = vmax.f32 %v868, 0.0
    %v933 = vmax.f32 %v869, 0.0
    %v934 = vmax.f32 %v870, 0.0
    %v935 = vmax.f32 %v871, 0.0
    %v936 = vmax.f32 %v872, 0.0
    %v937 = vmax.f32 %v873, 0.0
    %v938 = vmax.f32 %v874, 0.0
    %v939 = vmax.f32 %v875, 0.0
    %v940 = vmax.f32 %v876, 0.0
    %v941 = vmax.f32 %v877, 0.0
    %v942 = vmax.f32 %v878, 0.0
    %v943 = vmax.f32 %v879, 0.0
    %v944 = vmax.f32 %v880, 0.0
    %v945 = vmax.f32 %v881, 0.0
    %v946 = vmax.f32 %v882, 0.0
    %v947 = vmax.f32 %v883, 0.0
    %v948 = vmax.f32 %v884, 0.0
    %v949 = vmax.f32 %v885, 0.0
    %v950 = vmax.f32 %v886, 0.0
    %v951 = vmax.f32 %v887, 0.0
    %v952 = vmax.f32 %v888, 0.0
    %v953 = vmax.f32 %v889, 0.0
    %v954 = vmax.f32 %v890, 0.0
    %v955 = vmax.f32 %v891, 0.0
    %v956 = vmax.f32 %v892, 0.0
    %v957 = vmax.f32 %v893, 0.0
    %v958 = vmax.f32 %v894, 0.0
    %v959 = vmax.f32 %v895, 0.0
    %v960 = vmax.f32 %v896, 0.0
    %v961 = vmax.f32 %v897, 0.0
    %v962 = vmax.f32 %v898, 0.0
    %v963 = vmax.f32 %v899, 0.0
    %v964 = vmax.f32 %v900, 0.0
    %v965 = vmax.f32 %v901, 0.0
    %v966 = vmax.f32 %v902, 0.0
    %v967 = vmax.f32 %v903, 0.0
    %v968 = vmax.f32 %v904, 0.0
    %v969 = vmax.f32 %v905, 0.0
    %v970 = vmax.f32 %v906, 0.0
    %v971 = vmax.f32 %v907, 0.0
    %v972 = vmax.f32 %v908, 0.0
    %v973 = vmax.f32 %v909, 0.0
    %v974 = vmax.f32 %v910, 0.0
    %v975 = vmax.f32 %v911, 0.0
    %v976 = vmax.f32 %v912, 0.0
    %v977 = vmax.f32 %v913, 0.0
    %v978 = vmax.f32 %v914, 0.0
    %v979 = vmax.f32 %v915, 0.0
    %v980 = vmax.f32 %v916, 0.0
    %v981 = vmax.f32 %v917, 0.0
    %v982 = vmax.f32 %v918, 0.0
    %v983 = vmax.f32 %v919, 0.0
    %v984 = vmax.f32 %v920, 0.0
    %v985 = vmax.f32 %v921, 0.0
    %v986 = vmax.f32 %v922, 0.0
    %v987 = vmax.f32 %v923, 0.0
    %988 = vst.msk [vmem:[%s3] sm:$0xff] %vm724, %v924
    %989 = vst.msk [vmem:[%s3 + $0x8] sm:$0xff] %vm724, %v925
    %990 = vst.msk [vmem:[%s3 + $0x10] sm:$0xff] %vm724, %v926
    %991 = vst.msk [vmem:[%s3 + $0x18] sm:$0xff] %vm724, %v927
    %992 = vst.msk [vmem:[%s3 + $0x20] sm:$0xff] %vm724, %v928
    %993 = vst.msk [vmem:[%s3 + $0x28] sm:$0xff] %vm724, %v929
    %994 = vst.msk [vmem:[%s3 + $0x30] sm:$0xff] %vm724, %v930
    %995 = vst.msk [vmem:[%s3 + $0x38] sm:$0xff] %vm724, %v931
    %996 = vst.msk [vmem:[%s3 + $0x40] sm:$0xff] %vm724, %v932
    %997 = vst.msk [vmem:[%s3 + $0x48] sm:$0xff] %vm724, %v933
    %998 = vst.msk [vmem:[%s3 + $0x50] sm:$0xff] %vm724, %v934
    %999 = vst.msk [vmem:[%s3 + $0x58] sm:$0xff] %vm724, %v935
    %1000 = vst.msk [vmem:[%s3 + $0x60] sm:$0xff] %vm724, %v936
    %1001 = vst.msk [vmem:[%s3 + $0x68] sm:$0xff] %vm724, %v937
    %1002 = vst.msk [vmem:[%s3 + $0x70] sm:$0xff] %vm724, %v938
    %1003 = vst.msk [vmem:[%s3 + $0x78] sm:$0xff] %vm724, %v939
    %1004 = vst.msk [vmem:[%s3 + $0x80] sm:$0xff] %vm724, %v940
    %1005 = vst.msk [vmem:[%s3 + $0x88] sm:$0xff] %vm724, %v941
    %1006 = vst.msk [vmem:[%s3 + $0x90] sm:$0xff] %vm724, %v942
    %1007 = vst.msk [vmem:[%s3 + $0x98] sm:$0xff] %vm724, %v943
    %1008 = vst.msk [vmem:[%s3 + $0xa0] sm:$0xff] %vm724, %v944
    %1009 = vst.msk [vmem:[%s3 + $0xa8] sm:$0xff] %vm724, %v945
    %1010 = vst.msk [vmem:[%s3 + $0xb0] sm:$0xff] %vm724, %v946
    %1011 = vst.msk [vmem:[%s3 + $0xb8] sm:$0xff] %vm724, %v947
    %1012 = vst.msk [vmem:[%s3 + $0xc0] sm:$0xff] %vm724, %v948
    %1013 = vst.msk [vmem:[%s3 + $0xc8] sm:$0xff] %vm724, %v949
    %1014 = vst.msk [vmem:[%s3 + $0xd0] sm:$0xff] %vm724, %v950
    %1015 = vst.msk [vmem:[%s3 + $0xd8] sm:$0xff] %vm724, %v951
    %1016 = vst.msk [vmem:[%s3 + $0xe0] sm:$0xff] %vm724, %v952
    %1017 = vst.msk [vmem:[%s3 + $0xe8] sm:$0xff] %vm724, %v953
    %1018 = vst.msk [vmem:[%s3 + $0xf0] sm:$0xff] %vm724, %v954
    %1019 = vst.msk [vmem:[%s3 + $0xf8] sm:$0xff] %vm724, %v955
    %1020 = vst.msk [vmem:[%s3 + $0x100] sm:$0xff] %vm724, %v956
    %1021 = vst.msk [vmem:[%s3 + $0x108] sm:$0xff] %vm724, %v957
    %1022 = vst.msk [vmem:[%s3 + $0x110] sm:$0xff] %vm724, %v958
    %1023 = vst.msk [vmem:[%s3 + $0x118] sm:$0xff] %vm724, %v959
    %1024 = vst.msk [vmem:[%s3 + $0x120] sm:$0xff] %vm724, %v960
    %1025 = vst.msk [vmem:[%s3 + $0x128] sm:$0xff] %vm724, %v961
    %1026 = vst.msk [vmem:[%s3 + $0x130] sm:$0xff] %vm724, %v962
    %1027 = vst.msk [vmem:[%s3 + $0x138] sm:$0xff] %vm724, %v963
    %1028 = vst.msk [vmem:[%s3 + $0x140] sm:$0xff] %vm724, %v964
    %1029 = vst.msk [vmem:[%s3 + $0x148] sm:$0xff] %vm724, %v965
    %1030 = vst.msk [vmem:[%s3 + $0x150] sm:$0xff] %vm724, %v966
    %1031 = vst.msk [vmem:[%s3 + $0x158] sm:$0xff] %vm724, %v967
    %1032 = vst.msk [vmem:[%s3 + $0x160] sm:$0xff] %vm724, %v968
    %1033 = vst.msk [vmem:[%s3 + $0x168] sm:$0xff] %vm724, %v969
    %1034 = vst.msk [vmem:[%s3 + $0x170] sm:$0xff] %vm724, %v970
    %1035 = vst.msk [vmem:[%s3 + $0x178] sm:$0xff] %vm724, %v971
    %1036 = vst.msk [vmem:[%s3 + $0x180] sm:$0xff] %vm724, %v972
    %1037 = vst.msk [vmem:[%s3 + $0x188] sm:$0xff] %vm724, %v973
    %1038 = vst.msk [vmem:[%s3 + $0x190] sm:$0xff] %vm724, %v974
    %1039 = vst.msk [vmem:[%s3 + $0x198] sm:$0xff] %vm724, %v975
    %1040 = vst.msk [vmem:[%s3 + $0x1a0] sm:$0xff] %vm724, %v976
    %1041 = vst.msk [vmem:[%s3 + $0x1a8] sm:$0xff] %vm724, %v977
    %1042 = vst.msk [vmem:[%s3 + $0x1b0] sm:$0xff] %vm724, %v978
    %1043 = vst.msk [vmem:[%s3 + $0x1b8] sm:$0xff] %vm724, %v979
    %1044 = vst.msk [vmem:[%s3 + $0x1c0] sm:$0xff] %vm724, %v980
    %1045 = vst.msk [vmem:[%s3 + $0x1c8] sm:$0xff] %vm724, %v981
    %1046 = vst.msk [vmem:[%s3 + $0x1d0] sm:$0xff] %vm724, %v982
    %1047 = vst.msk [vmem:[%s3 + $0x1d8] sm:$0xff] %vm724, %v983
    %1048 = vst.msk [vmem:[%s3 + $0x1e0] sm:$0xff] %vm724, %v984
    %1049 = vst.msk [vmem:[%s3 + $0x1e8] sm:$0xff] %vm724, %v985
    %1050 = vst.msk [vmem:[%s3 + $0x1f0] sm:$0xff] %vm724, %v986
    %1051 = vst.msk [vmem:[%s3 + $0x1f8] sm:$0xff] %vm724, %v987
  $region21: #{tpu_custom_call.1} parent=0 // pred_fallthru
    _
  // Predicated region
  $region22: #{tpu_custom_call.1} parent=0 // pred_check
    _
  $region23: #{tpu_custom_call.1} parent=0 // pred_check_branch
    %1053 = sbr.rel (0) target = $region25
  $region24: #{tpu_custom_call.1} parent=0 // pred_region
    _
  $region25: #{tpu_custom_call.1} parent=0 // pred_fallthru
    _
  // Predicated region
  $region26: #{tpu_custom_call.1} parent=0 // pred_check
    _
  $region27: #{tpu_custom_call.1} parent=0 // pred_check_branch
    %1055 = sbr.rel (0) target = $region29
  $region28: #{tpu_custom_call.1} parent=0 // pred_region
    _
  $region29: #{tpu_custom_call.1} parent=0 // pred_fallthru
    _

</llo_original>
